<compile_context>
chip_gen: v6e
topology: v6e:2x2x1
jax: 0.10.0
libtpu: 0.0.40
codegen_flags: <defaults>
</compile_context>

<pallas_src>
import jax
import jax.numpy as jnp
from jax.experimental import pallas as pl
from jax.experimental.pallas import tpu as pltpu


def roswish_kernel(x_ref, alpha_ref, beta_half_ref, o_ref):
    # Elementwise hot path: compute in f32 (avoids bf16 cast churn on v5e and
    # matches the f32 PyTorch reference), single EUP tanh per element.
    x = x_ref[...].astype(jnp.float32)            # (tb, th)
    a = alpha_ref[...].astype(jnp.float32)        # (1, th) -> broadcasts over rows
    bh = beta_half_ref[...].astype(jnp.float32)   # (1, th) == 0.5 * beta
    # (x + a) * sigmoid(b * x) - a/2  ==  0.5 * (x + (x + a) * tanh(0.5 * b * x))
    t = jnp.tanh(x * bh)
    o_ref[...] = (0.5 * (x + (x + a) * t)).astype(o_ref.dtype)


def _round_up(n, m):
    return ((n + m - 1) // m) * m


def roswish(x, alpha, beta, *, tb=None, th=None,
            vmem_limit_bytes=48 * 1024 * 1024):
    """RoSwish: (x + alpha) * sigmoid(x * beta) - alpha / 2.

    x: (B, H); alpha, beta: (1, H). Returns (B, H) in x.dtype.
    """
    B, H = x.shape
    assert alpha.shape == (1, H) and beta.shape == (1, H)

    itemsize = jnp.dtype(x.dtype).itemsize
    sub = max(8, 32 // itemsize)  # sublane multiple: 8 f32, 16 bf16, 32 int8/fp8

    # Hidden (lane) tile: multiple of 128 when possible; otherwise use the
    # "block equals full array dim" exception so x never needs wrapper padding.
    if th is None:
        th = min(H, 2048) if H % 128 == 0 else H

    # Batch (sublane) tile: ~4 MiB per tile to amortize the ~0.35 us per-step
    # pipeline overhead; dtype-aware sublane rounding.
    if tb is None:
        max_rows = max(sub, (4 * 1024 * 1024) // max(1, th * itemsize))
        max_rows = max(sub, (max_rows // sub) * sub)
        tb = min(_round_up(B, sub), max_rows, 1024)

    nb = pl.cdiv(B, tb)
    nh = pl.cdiv(H, th)
    # Guarantee >= 2 blocks along a parallel axis so both v7x TensorCores can
    # shard the grid on mid-size inputs.
    if nb * nh < 2 and B >= 2 * sub:
        tb = _round_up((B + 1) // 2, sub)
        nb = pl.cdiv(B, tb)

    # Fold the 0.5 of the tanh identity into beta once (O(H), negligible traffic).
    beta_half = beta * 0.5

    cost = pl.CostEstimate(
        flops=6 * B * H,
        transcendentals=B * H,
        bytes_accessed=2 * B * H * itemsize + 2 * H * jnp.dtype(beta.dtype).itemsize,
    )

    # Grid: hidden-blocks outermost so alpha/beta block indices only change per
    # outer step (no re-DMA of the small (1, th) slices every inner iteration).
    return pl.pallas_call(
        roswish_kernel,
        out_shape=jax.ShapeDtypeStruct((B, H), x.dtype),
        grid_spec=pltpu.PrefetchScalarGridSpec(
            num_scalar_prefetch=0,
            grid=(nh, nb),
            in_specs=[
                pl.BlockSpec((tb, th), lambda h, b: (b, h)),   # x tile
                pl.BlockSpec((1, th), lambda h, b: (0, h)),    # alpha slice
                pl.BlockSpec((1, th), lambda h, b: (0, h)),    # beta/2 slice
            ],
            out_specs=pl.BlockSpec((tb, th), lambda h, b: (b, h)),
        ),
        compiler_params=pltpu.CompilerParams(
            dimension_semantics=("parallel", "parallel"),
            vmem_limit_bytes=vmem_limit_bytes,
        ),
        cost_estimate=cost,
    )(x, alpha, beta_half)


def _reference(x, alpha, beta):
    return (x + alpha) * jax.nn.sigmoid(x * beta) - alpha / 2


if __name__ == "__main__":
    key = jax.random.PRNGKey(0)
    k1, k2 = jax.random.split(key)

    # Case 1: small shapes consistent with the MNIST-AE hidden layer.
    batch, n_hidden = 16, 128
    alpha = jnp.full((1, n_hidden), 0.817, dtype=jnp.float32)
    beta = jnp.full((1, n_hidden), 3.0, dtype=jnp.float32)
    x = jax.random.normal(k1, (batch, n_hidden), dtype=jnp.float32)

    out = jax.block_until_ready(roswish(x, alpha, beta))
    ref = _reference(x, alpha, beta)
    assert out.shape == (batch, n_hidden)
    assert jnp.allclose(out, ref, atol=1e-5, rtol=1e-5)

    # Case 2: ragged shapes — exercises the cdiv grid + masked-tail path
    # (no wrapper padding / slicing anywhere).
    b2, h2 = 37, 100
    alpha2 = jnp.full((1, h2), 0.817, dtype=jnp.float32)
    beta2 = jnp.full((1, h2), 3.0, dtype=jnp.float32)
    x2 = jax.random.normal(k2, (b2, h2), dtype=jnp.float32)

    out2 = jax.block_until_ready(roswish(x2, alpha2, beta2))
    ref2 = _reference(x2, alpha2, beta2)
    assert out2.shape == (b2, h2)
    assert jnp.allclose(out2, ref2, atol=1e-5, rtol=1e-5)

    print("KERNEL_OK")
</pallas_src>

<mosaic_0001>
module attributes {stable_mosaic.version = 11 : i64} {
  func.func @roswish_kernel(%arg0: i32, %arg1: i32, %arg2: memref<8x128xf32, #tpu.memory_space<vmem>>, %arg3: memref<1x128xf32, #tpu.memory_space<vmem>>, %arg4: memref<1x128xf32, #tpu.memory_space<vmem>>, %arg5: memref<8x128xf32, #tpu.memory_space<vmem>>) attributes {dimension_semantics = [#tpu.dimension_semantics<parallel>, #tpu.dimension_semantics<parallel>], iteration_bounds = array<i64: 1, 2>, scalar_prefetch = 0 : i64, scratch_operands = 0 : i64, tpu.core_type = #tpu.core_type<tc>, window_params = [{transform_indices = @transform_0, window_bounds = array<i64: 8, 128>}, {transform_indices = @transform_1, window_bounds = array<i64: 1, 128>}, {transform_indices = @transform_2, window_bounds = array<i64: 1, 128>}, {transform_indices = @transform_3, window_bounds = array<i64: 8, 128>}]} {
    %c0 = arith.constant 0 : index
    %c0_0 = arith.constant 0 : index
    %0 = vector.load %arg2[%c0, %c0_0] : memref<8x128xf32, #tpu.memory_space<vmem>>, vector<8x128xf32>
    %c0_1 = arith.constant 0 : index
    %c0_2 = arith.constant 0 : index
    %1 = vector.load %arg3[%c0_1, %c0_2] : memref<1x128xf32, #tpu.memory_space<vmem>>, vector<1x128xf32>
    %c0_3 = arith.constant 0 : index
    %c0_4 = arith.constant 0 : index
    %2 = vector.load %arg4[%c0_3, %c0_4] : memref<1x128xf32, #tpu.memory_space<vmem>>, vector<1x128xf32>
    %3 = vector.broadcast %2 : vector<1x128xf32> to vector<8x128xf32>
    %4 = arith.mulf %0, %3 : vector<8x128xf32>
    %5 = math.tanh %4 : vector<8x128xf32>
    %6 = vector.broadcast %1 : vector<1x128xf32> to vector<8x128xf32>
    %7 = arith.addf %0, %6 : vector<8x128xf32>
    %8 = arith.mulf %7, %5 : vector<8x128xf32>
    %9 = arith.addf %0, %8 : vector<8x128xf32>
    %cst = arith.constant 5.000000e-01 : f32
    %10 = vector.broadcast %cst : f32 to vector<8x128xf32>
    %11 = arith.mulf %10, %9 : vector<8x128xf32>
    %c0_5 = arith.constant 0 : index
    %c0_6 = arith.constant 0 : index
    %12 = vector.load %arg5[%c0_5, %c0_6] : memref<8x128xf32, #tpu.memory_space<vmem>>, vector<8x128xf32>
    tpu.vector_store %arg5[%c0_5, %c0_6], %11 {strides = array<i32>} : memref<8x128xf32, #tpu.memory_space<vmem>>, vector<8x128xf32>,
    return
  }
  func.func @transform_0(%arg0: i32, %arg1: i32) -> (i32, i32) {
    %c0_i32 = arith.constant 0 : i32
    return %arg1, %arg0 : i32, i32
  }
  func.func @transform_1(%arg0: i32, %arg1: i32) -> (i32, i32) {
    %c0_i32 = arith.constant 0 : i32
    %c0_i32_0 = arith.constant 0 : i32
    return %c0_i32, %arg0 : i32, i32
  }
  func.func @transform_2(%arg0: i32, %arg1: i32) -> (i32, i32) {
    %c0_i32 = arith.constant 0 : i32
    %c0_i32_0 = arith.constant 0 : i32
    return %c0_i32, %arg0 : i32, i32
  }
  func.func @transform_3(%arg0: i32, %arg1: i32) -> (i32, i32) {
    %c0_i32 = arith.constant 0 : i32
    return %arg1, %arg0 : i32, i32
  }
}

</mosaic_0001>

<llo_original>
// kernel: tpu_custom_call.1
$region0: #{tpu_custom_call.1}
  #allocation0 [shape = 'u32[]', space=smem, size = 0x4, offset = 0x4, fixed_abs, tag = 'smem constant byte address 0x4 - core index']
  #allocation1 [shape = 'u32[144,128]{1,0:T(1,128)}', space=vmem, size = 0x12000, scoped, tag = 'internal scratch']
  %s0 = inlined_call_operand.hbm [shape: f32[16,128], index: 0, kind: input, shape index: {}]
  %s1 = inlined_call_operand.vmem [shape: f32[1,128], index: 1, kind: input, shape index: {}]
  %s2 = inlined_call_operand.vmem [shape: f32[1,128], index: 2, kind: input, shape index: {}]
  %s3 = inlined_call_operand.hbm [shape: f32[16,128], index: 3, kind: output, shape index: {}]
  %s4 = sld [smem:[#allocation0]]
  $region49: #{tpu_custom_call.1} parent=0
    _
  %s6 = ssub.s32 1, %s4
  %s7 = scalar_select 0, %s6, %s4
  $region1: #{tpu_custom_call.1} parent=0
    #allocation2 [shape = 'u8[8192]{0}', space=vmem, size = 0x2000, scoped, tag = 'input window, operand 0']
    #allocation3 [shape = 's32[2]{0}', space=sflag, size = 0x8, scoped, tag = 'scoped memory for tpu_custom_call.1']
    #allocation4 [shape = 's32[2]{0}', space=sflag, size = 0x8, scoped, tag = 'scoped memory for tpu_custom_call.1']
    #allocation5 [shape = 'u8[8192]{0}', space=vmem, size = 0x2000, scoped, tag = 'output window, operand 0']
    %8 = vsyncpa [#allocation3], 0
    %s9 = scalar_lea.sflag [#allocation3], 1
    %10 = vsyncpa %s9, 0
    %11 = vsyncpa [#allocation4], 0
    %s12 = scalar_lea.sflag [#allocation4], 1
    %13 = vsyncpa %s12, 0
    loop: start=0, step=1, limit=4
    $region2: #{tpu_custom_call.1} parent=1 // loop_pre_header
      _
    $region3: #{tpu_custom_call.1} parent=1 // loop_header
      %s15 = sphi 0, %s19
      %p16 = scmp.ge.s32.totalorder %s15, 4
      %s22 = sphi 0, %s34
      %s23 = sphi 0, %s30
      %s24 = sphi 0, %s22
      %s25 = sphi 0, %s23
      %s26 = sphi 0, %s24
      %s27 = sphi 0, %s25
      %s39 = sphi 0, %s41
      %s42 = sphi 0, %s39
      %s43 = sphi 0, %s42
      %s59 = sphi 0, %s43
      %s65 = sphi 0, %s67
      %s68 = sphi 0, %s65
      %s69 = sphi 0, %s68
      %s85 = sphi 0, %s69
      %s91 = sphi 0, %s93
      %s94 = sphi 0, %s91
      %s95 = sphi 0, %s94
      %s111 = sphi 0, %s95
      %s119 = sphi 0, %s121
      %s122 = sphi 0, %s119
      %s123 = sphi 0, %s122
      %s139 = sphi 0, %s123
    $region4: #{tpu_custom_call.1} parent=1 // loop_header_branch
      %18 = sbr.rel (%p16) target = $region8
    $region5: #{tpu_custom_call.1} parent=1 // loop_body
      %s20 = ssub.s32 %s15, 1
      %s21 = ssub.s32 %s15, 2
      %s28 = sadd.s32 1, %s23
      %p29 = scmp.ge.s32.totalorder %s28, 2
      %s30 = scalar_select %p29, 0, %s28
      %s31 = sadd.s32 1, %s22
      %s32 = scalar_select %p29, %s31, %s22
      %p33 = scmp.ge.s32.totalorder %s32, 1
      %s34 = scalar_select %p33, 0, %s32
      %s35 = ssub.s32 %s23, %s30
      %s36 = ssub.s32 %s22, %s34
      %s37 = sor.u32 %s35, %s36
      %p38 = scmp.eq.s32.totalorder %s37, 0
      %s40 = sadd.s32 %s39, 1
      %s41 = scalar_select %p38, %s39, %s40
      %p44 = pneg %p38
      %p45 = scmp.eq.s32.totalorder %s15, 1
      %p46 = por %p44, %p45
      %p47 = scmp.ne.s32.totalorder %s39, %s42
      %p48 = scmp.eq.s32.totalorder %s15, 0
      %p49 = por %p47, %p48
      %p50 = scmp.ne.s32.totalorder %s39, %s42
      %p51 = scmp.eq.s32.totalorder %s20, 1
      %p52 = por %p50, %p51
      %p53 = scmp.ne.s32.totalorder %s42, %s43
      %p54 = scmp.eq.s32.totalorder %s20, 0
      %p55 = por %p53, %p54
      %p56 = scmp.ne.s32.totalorder %s42, %s43
      %p57 = scmp.eq.s32.totalorder %s21, 1
      %p58 = por %p56, %p57
      %p60 = scmp.ne.s32.totalorder %s43, %s59
      %p61 = scmp.eq.s32.totalorder %s21, 0
      %p62 = por %p60, %p61
      %s63 = ssub.s32 %s22, %s34
      %p64 = scmp.eq.s32.totalorder %s63, 0
      %s66 = sadd.s32 %s65, 1
      %s67 = scalar_select %p64, %s65, %s66
      %p70 = pneg %p64
      %p71 = scmp.eq.s32.totalorder %s15, 1
      %p72 = por %p70, %p71
      %p73 = scmp.ne.s32.totalorder %s65, %s68
      %p74 = scmp.eq.s32.totalorder %s15, 0
      %p75 = por %p73, %p74
      %p76 = scmp.ne.s32.totalorder %s65, %s68
      %p77 = scmp.eq.s32.totalorder %s20, 1
      %p78 = por %p76, %p77
      %p79 = scmp.ne.s32.totalorder %s68, %s69
      %p80 = scmp.eq.s32.totalorder %s20, 0
      %p81 = por %p79, %p80
      %p82 = scmp.ne.s32.totalorder %s68, %s69
      %p83 = scmp.eq.s32.totalorder %s21, 1
      %p84 = por %p82, %p83
      %p86 = scmp.ne.s32.totalorder %s69, %s85
      %p87 = scmp.eq.s32.totalorder %s21, 0
      %p88 = por %p86, %p87
      %s89 = ssub.s32 %s22, %s34
      %p90 = scmp.eq.s32.totalorder %s89, 0
      %s92 = sadd.s32 %s91, 1
      %s93 = scalar_select %p90, %s91, %s92
      %p96 = pneg %p90
      %p97 = scmp.eq.s32.totalorder %s15, 1
      %p98 = por %p96, %p97
      %p99 = scmp.ne.s32.totalorder %s91, %s94
      %p100 = scmp.eq.s32.totalorder %s15, 0
      %p101 = por %p99, %p100
      %p102 = scmp.ne.s32.totalorder %s91, %s94
      %p103 = scmp.eq.s32.totalorder %s20, 1
      %p104 = por %p102, %p103
      %p105 = scmp.ne.s32.totalorder %s94, %s95
      %p106 = scmp.eq.s32.totalorder %s20, 0
      %p107 = por %p105, %p106
      %p108 = scmp.ne.s32.totalorder %s94, %s95
      %p109 = scmp.eq.s32.totalorder %s21, 1
      %p110 = por %p108, %p109
      %p112 = scmp.ne.s32.totalorder %s95, %s111
      %p113 = scmp.eq.s32.totalorder %s21, 0
      %p114 = por %p112, %p113
      %s115 = ssub.s32 %s23, %s30
      %s116 = ssub.s32 %s22, %s34
      %s117 = sor.u32 %s115, %s116
      %p118 = scmp.eq.s32.totalorder %s117, 0
      %s120 = sadd.s32 %s119, 1
      %s121 = scalar_select %p118, %s119, %s120
      %p124 = pneg %p118
      %p125 = scmp.eq.s32.totalorder %s15, 1
      %p126 = por %p124, %p125
      %p127 = scmp.ne.s32.totalorder %s119, %s122
      %p128 = scmp.eq.s32.totalorder %s15, 0
      %p129 = por %p127, %p128
      %p130 = scmp.ne.s32.totalorder %s119, %s122
      %p131 = scmp.eq.s32.totalorder %s20, 1
      %p132 = por %p130, %p131
      %p133 = scmp.ne.s32.totalorder %s122, %s123
      %p134 = scmp.eq.s32.totalorder %s20, 0
      %p135 = por %p133, %p134
      %p136 = scmp.ne.s32.totalorder %s122, %s123
      %p137 = scmp.eq.s32.totalorder %s21, 1
      %p138 = por %p136, %p137
      %p140 = scmp.ne.s32.totalorder %s123, %s139
      %p141 = scmp.eq.s32.totalorder %s21, 0
      %p142 = por %p140, %p141
      %p143 = scmp.le.s32.totalorder 1, %s15
      %p144 = scmp.lt.s32.totalorder %s15, 3
      %p145 = pnand %p143, %p144
      %p146 = pneg %p145
      // Predicated region
      $region9: #{tpu_custom_call.1} parent=5 // pred_check
        _
      $region10: #{tpu_custom_call.1} parent=5 // pred_check_branch
        %148 = sbr.rel (%p145) target = $region12
      $region11: #{tpu_custom_call.1} parent=5 // pred_region
        %s149 = ssub.s32 %s15, 1
        // Predicated region
        $region13: #{tpu_custom_call.1} parent=11 // pred_check
          %p150 = pneg %p81
        $region14: #{tpu_custom_call.1} parent=11 // pred_check_branch
          %152 = sbr.rel (%p150) target = $region16
        $region15: #{tpu_custom_call.1} parent=11 // pred_region
          %p153 = scmp.lt.s32.totalorder %s24, 0
          %s154 = scalar_select %p153, %s24, 0
          %s155 = scalar_lea.vmem %s1, %s154
        $region16: #{tpu_custom_call.1} parent=11 // pred_fallthru
          _
        // Predicated region
        $region17: #{tpu_custom_call.1} parent=11 // pred_check
          %p156 = pneg %p107
        $region18: #{tpu_custom_call.1} parent=11 // pred_check_branch
          %158 = sbr.rel (%p156) target = $region20
        $region19: #{tpu_custom_call.1} parent=11 // pred_region
          %p159 = scmp.lt.s32.totalorder %s24, 0
          %s160 = scalar_select %p159, %s24, 0
          %s161 = scalar_lea.vmem %s2, %s160
        $region20: #{tpu_custom_call.1} parent=11 // pred_fallthru
          _
      $region12: #{tpu_custom_call.1} parent=5 // pred_fallthru
        _
      %p162 = scmp.lt.s32.totalorder %s15, 2
      // Predicated region
      $region21: #{tpu_custom_call.1} parent=5 // pred_check
        %p163 = pneg %p162
      $region22: #{tpu_custom_call.1} parent=5 // pred_check_branch
        %165 = sbr.rel (%p163) target = $region24
      $region23: #{tpu_custom_call.1} parent=5 // pred_region
        // Predicated region
        $region25: #{tpu_custom_call.1} parent=23 // pred_check
          %p166 = pneg %p49
        $region26: #{tpu_custom_call.1} parent=23 // pred_check_branch
          %168 = sbr.rel (%p166) target = $region28
        $region27: #{tpu_custom_call.1} parent=23 // pred_region
          %s169 = sand.u32 %s39, 1
          %s170 = scalar_lea.sflag [#allocation3], %s169
          %s171 = sand.u32 %s39, 1
          %s172 = smul.addr %s171, 8
          %s173 = scalar_lea.vmem [#allocation2], %s172
          %s175 = ssub.s32 128, 128
          %176 = vsyncadd %s170, %s175
          %s177 = sadd.s32 %s22, %s23
          %s178 = smul.addr %s177, 128
          %s179 = scalar_lea.hbm %s0, %s178
          %s181 = sshll.u32 %s173, 4
          %s182 = int_to_ptr.vmem [resolvable:$true] %s181
          %184 = dma.hbm_to_vmem [thread:$0]  %s179, 128, %s182, %s170
        $region28: #{tpu_custom_call.1} parent=23 // pred_fallthru
          _
      $region24: #{tpu_custom_call.1} parent=5 // pred_fallthru
        _
      %p185 = scmp.le.s32.totalorder 1, %s15
      %p186 = scmp.lt.s32.totalorder %s15, 3
      %p187 = pnand %p185, %p186
      %p188 = pneg %p187
      // Predicated region
      $region29: #{tpu_custom_call.1} parent=5 // pred_check
        _
      $region30: #{tpu_custom_call.1} parent=5 // pred_check_branch
        %190 = sbr.rel (%p187) target = $region32
      $region31: #{tpu_custom_call.1} parent=5 // pred_region
        %s191 = ssub.s32 %s15, 1
        %s192 = sand.u32 %s42, 1
        %s193 = scalar_lea.sflag [#allocation3], %s192
        %s194 = sand.u32 %s42, 1
        %s195 = smul.addr %s194, 8
        %s196 = scalar_lea.vmem [#allocation2], %s195
        // Predicated region
        $region33: #{tpu_custom_call.1} parent=31 // pred_check
          %p197 = pneg %p55
        $region34: #{tpu_custom_call.1} parent=31 // pred_check_branch
          %199 = sbr.rel (%p197) target = $region36
        $region35: #{tpu_custom_call.1} parent=31 // pred_region
          %200 = dma.done %s193, 128
        $region36: #{tpu_custom_call.1} parent=31 // pred_fallthru
          _
        %s201 = sand.u32 %s42, 1
        %s202 = scalar_lea.sflag [#allocation3], %s201
        %s203 = sand.u32 %s42, 1
        %s204 = smul.addr %s203, 8
        %s205 = scalar_lea.vmem [#allocation2], %s204
        %p206 = pneg %p55
        %p207 = pneg %p52
        %p208 = scmp.lt.s32.totalorder %s24, 0
        %s209 = scalar_select %p208, %s24, 0
        %s210 = scalar_lea.vmem %s1, %s209
        %p211 = pneg %p81
        %p212 = pneg %p78
        %p213 = scmp.lt.s32.totalorder %s24, 0
        %s214 = scalar_select %p213, %s24, 0
        %s215 = scalar_lea.vmem %s2, %s214
        %p216 = pneg %p107
        %p217 = pneg %p104
        %p218 = pneg %p135
        %p219 = pneg %p132
        %s220 = sand.u32 %s122, 1
        %s221 = scalar_lea.sflag [#allocation4], %s220
        %s222 = sand.u32 %s122, 1
        %s223 = smul.addr %s222, 8
        %s224 = scalar_lea.vmem [#allocation5], %s223
        %p225 = scmp.lt.s32.totalorder %s24, 0
        %s226 = scalar_select %p225, %s24, 0
        %s227 = scalar_lea.vmem %s1, %s226
        %p228 = scmp.lt.s32.totalorder %s24, 0
        %s229 = scalar_select %p228, %s24, 0
        %s230 = scalar_lea.vmem %s2, %s229
        %v231 = vld [vmem:[%s196] sm:$0xff]
        %v232 = vld [vmem:[%s227] sm:$0x1]
        %v233 = vld [vmem:[%s230] sm:$0x1]
        %v235 = vlaneseq
        %v236 = vshrl.u32 %v235, 7
        %v237 = vsub.s32 0, %v236
        %v238 = vrot.slane %v233, %v237
        %v240 = vmul.f32 %v231, %v238
        %v241 = vtanh.pop %v240
        %v243 = vlaneseq
        %v244 = vshrl.u32 %v243, 7
        %v245 = vsub.s32 0, %v244
        %v246 = vrot.slane %v232, %v245
        %v248 = vadd.f32 %v231, %v246
        %v249 = vmul.f32 %v248, %v241
        %v250 = vadd.f32 %v231, %v249
        %v251 = vmul.f32 %v250, 0.5
        %252 = vst [vmem:[%s224] sm:$0xff] %v251
        %s253 = sand.u32 %s122, 1
        %s254 = scalar_lea.sflag [#allocation4], %s253
        %s255 = sand.u32 %s122, 1
        %s256 = smul.addr %s255, 8
        %s257 = scalar_lea.vmem [#allocation5], %s256
        // Predicated region
        $region37: #{tpu_custom_call.1} parent=31 // pred_check
          %p258 = pneg %p132
        $region38: #{tpu_custom_call.1} parent=31 // pred_check_branch
          %260 = sbr.rel (%p258) target = $region40
        $region39: #{tpu_custom_call.1} parent=31 // pred_region
          %s262 = ssub.s32 128, 128
          %263 = vsyncadd %s254, %s262
          %s264 = sadd.s32 %s24, %s25
          %s265 = smul.addr %s264, 128
          %s266 = scalar_lea.hbm %s3, %s265
          %s268 = sshll.u32 %s257, 4
          %s269 = int_to_ptr.vmem [resolvable:$true] %s268
          %271 = dma.vmem_to_hbm [thread:$0]  %s269, 128, %s266, %s254
        $region40: #{tpu_custom_call.1} parent=31 // pred_fallthru
          _
      $region32: #{tpu_custom_call.1} parent=5 // pred_fallthru
        _
      %p272 = scmp.le.s32.totalorder 2, %s15
      // Predicated region
      $region41: #{tpu_custom_call.1} parent=5 // pred_check
        %p273 = pneg %p272
      $region42: #{tpu_custom_call.1} parent=5 // pred_check_branch
        %275 = sbr.rel (%p273) target = $region44
      $region43: #{tpu_custom_call.1} parent=5 // pred_region
        %s276 = ssub.s32 %s15, 2
        // Predicated region
        $region45: #{tpu_custom_call.1} parent=43 // pred_check
          %p277 = pneg %p138
        $region46: #{tpu_custom_call.1} parent=43 // pred_check_branch
          %279 = sbr.rel (%p277) target = $region48
        $region47: #{tpu_custom_call.1} parent=43 // pred_region
          %s280 = sand.u32 %s123, 1
          %s281 = scalar_lea.sflag [#allocation4], %s280
          %s282 = sand.u32 %s123, 1
          %s283 = smul.addr %s282, 8
          %s284 = scalar_lea.vmem [#allocation5], %s283
          %285 = dma.done %s281, 128
        $region48: #{tpu_custom_call.1} parent=43 // pred_fallthru
          _
      $region44: #{tpu_custom_call.1} parent=5 // pred_fallthru
        _
    $region6: #{tpu_custom_call.1} parent=1 // loop_footer
      %s19 = sadd.s32 1, %s15
    $region7: #{tpu_custom_call.1} parent=1 // loop_footer_branch
      %14 = sbr.rel target = $region3
    $region8: #{tpu_custom_call.1} parent=1 // loop_exit
      _
    %286 = vsyncpa [#allocation3], 1
    %s287 = scalar_lea.sflag [#allocation3], 1
    %288 = vsyncpa %s287, 1
    %289 = vsyncpa [#allocation4], 1
    %s290 = scalar_lea.sflag [#allocation4], 1
    %291 = vsyncpa %s290, 1

</llo_original>
